<compile_context>
chip_gen: v5e
topology: v5e:2x2
jax: 0.10.0
libtpu: 0.0.40
codegen_flags: <defaults>
</compile_context>

<pallas_src>
import functools

import jax
import jax.numpy as jnp
from jax import lax
from jax.experimental import pallas as pl
from jax.experimental.pallas import tpu as pltpu


def _conv3x3_kernel(x_ref, w_ref, b_ref, o_ref, *, H, W):
    # x_ref: (1, Cin, H*W)   flattened spatial-last input for one image
    # w_ref: (Cout, 9*Cin)   tap (ky,kx) lives in columns [(ky*3+kx)*Cin, +Cin)
    # b_ref: (Cout, 1)
    # o_ref: (1, Cout, H*W)  NCHW output, spatial flattened (lane-dense)
    Cin = x_ref.shape[1]
    HW = H * W

    x = x_ref[0]                                           # (Cin, HW)
    # In-register zero padding: one zero row above/below the image plus one
    # extra element so every 3x3 tap becomes a contiguous shift of the flat axis.
    zpad = jnp.zeros((Cin, W + 1), dtype=x.dtype)
    q = jnp.concatenate([zpad, x, zpad], axis=1)           # (Cin, HW + 2W + 2)

    # Column index of each flattened output position (for border masking).
    col = lax.broadcasted_iota(jnp.int32, (1, HW), 1) % W
    not_left = col > 0          # left tap (kx==0) is valid
    not_right = col < W - 1     # right tap (kx==2) is valid

    # Build the im2col patch: 9 shifted slabs stacked along the contraction dim.
    slabs = []
    for ky in range(3):
        for kx in range(3):
            s = ky * W + kx
            xs = q[:, s:s + HW]                            # (Cin, HW) shifted slab
            # Kill row-wraparound values for the left / right taps.
            if kx == 0:
                xs = jnp.where(not_left, xs, 0.0)
            elif kx == 2:
                xs = jnp.where(not_right, xs, 0.0)
            slabs.append(xs)
    patch = jnp.concatenate(slabs, axis=0)                 # (9*Cin, HW)

    # Single MXU matmul: (Cout, 9*Cin) @ (9*Cin, HW) -> f32 (Cout, HW).
    acc = jnp.dot(w_ref[...], patch, preferred_element_type=jnp.float32)
    acc = acc + b_ref[...]                                 # broadcast (Cout, 1)
    o_ref[0] = acc.astype(o_ref.dtype)


def out_conv(x_nchw, weight, bias):
    """3x3 conv, stride 1, padding 1 (== nn.Conv2d(Cin, Cout, 3, padding=1)).

    x_nchw : (N, Cin, H, W)    float32
    weight : (Cout, Cin, 3, 3) float32 (PyTorch OIHW layout)
    bias   : (Cout,)           float32
    returns: (N, Cout, H, W)   float32
    """
    N, Cin, H, W = x_nchw.shape
    Cout = weight.shape[0]
    HW = H * W

    # Free reshapes only (no transpose, no pad) on the big tensor.
    x_flat = x_nchw.reshape(N, Cin, HW)
    # (Cout, Cin, 3, 3) -> (Cout, ky, kx, Cin) -> (Cout, 9*Cin); column order
    # matches the patch stacking order inside the kernel.
    w_flat = jnp.transpose(weight, (0, 2, 3, 1)).reshape(Cout, 9 * Cin)
    b2 = bias.reshape(Cout, 1)

    kernel = functools.partial(_conv3x3_kernel, H=H, W=W)

    out_flat = pl.pallas_call(
        kernel,
        out_shape=jax.ShapeDtypeStruct((N, Cout, HW), x_nchw.dtype),
        grid_spec=pltpu.PrefetchScalarGridSpec(
            num_scalar_prefetch=0,
            grid=(N,),
            in_specs=[
                pl.BlockSpec((1, Cin, HW), lambda n: (n, 0, 0)),
                pl.BlockSpec((Cout, 9 * Cin), lambda n: (0, 0)),
                pl.BlockSpec((Cout, 1), lambda n: (0, 0)),
            ],
            out_specs=pl.BlockSpec((1, Cout, HW), lambda n: (n, 0, 0)),
        ),
        compiler_params=pltpu.CompilerParams(
            dimension_semantics=("parallel",)
        ),
    )(x_flat, w_flat, b2)

    return out_flat.reshape(N, Cout, H, W)


if __name__ == "__main__":
    # OutConv(in_channels=4, out_channels=3): 3x3 conv, padding=1.
    N, Cin, H, W = 2, 4, 16, 16
    Cout = 3

    key = jax.random.PRNGKey(0)
    k_x, k_w, k_b = jax.random.split(key, 3)

    x = jax.random.normal(k_x, (N, Cin, H, W), dtype=jnp.float32)
    weight = jax.random.normal(k_w, (Cout, Cin, 3, 3), dtype=jnp.float32) * 0.1
    bias = jax.random.normal(k_b, (Cout,), dtype=jnp.float32) * 0.1

    out = out_conv(x, weight, bias)
    out = jax.block_until_ready(out)

    # Cross-check against XLA's reference convolution.
    ref = lax.conv_general_dilated(
        x, weight, window_strides=(1, 1), padding=((1, 1), (1, 1)),
        dimension_numbers=("NCHW", "OIHW", "NCHW"),
    ) + bias.reshape(1, Cout, 1, 1)

    assert out.shape == (N, Cout, H, W)
    assert jnp.allclose(out, ref, atol=1e-4, rtol=1e-4)

    print("KERNEL_OK")
</pallas_src>

<mosaic_0001>
module attributes {stable_mosaic.version = 11 : i64} {
  func.func @_conv3x3_kernel(%arg0: i32, %arg1: memref<1x4x256xf32, #tpu.memory_space<vmem>>, %arg2: memref<3x36xf32, #tpu.memory_space<vmem>>, %arg3: memref<3x1xf32, #tpu.memory_space<vmem>>, %arg4: memref<1x3x256xf32, #tpu.memory_space<vmem>>) attributes {dimension_semantics = [#tpu.dimension_semantics<parallel>], iteration_bounds = array<i64: 2>, scalar_prefetch = 0 : i64, scratch_operands = 0 : i64, tpu.core_type = #tpu.core_type<tc>, window_params = [{transform_indices = @transform_0, window_bounds = array<i64: 1, 4, 256>}, {pipeline_mode = #tpu.pipeline_mode<synchronous>, transform_indices = @transform_1, window_bounds = array<i64: 3, 36>}, {pipeline_mode = #tpu.pipeline_mode<synchronous>, transform_indices = @transform_2, window_bounds = array<i64: 3, 1>}, {transform_indices = @transform_3, window_bounds = array<i64: 1, 3, 256>}]} {
    %c0 = arith.constant 0 : index
    %c0_0 = arith.constant 0 : index
    %c0_1 = arith.constant 0 : index
    %0 = vector.load %arg1[%c0, %c0_0, %c0_1] : memref<1x4x256xf32, #tpu.memory_space<vmem>>, vector<1x4x256xf32>
    %1 = vector.shape_cast %0 : vector<1x4x256xf32> to vector<4x256xf32>
    %cst = arith.constant 0.000000e+00 : f32
    %2 = vector.broadcast %cst : f32 to vector<4x17xf32>
    %3 = tpu.concatenate %2, %1, %2 in 1 : vector<4x17xf32>, vector<4x256xf32>, vector<4x17xf32> -> vector<4x290xf32>
    %4 = tpu.iota {dimensions = array<i32: 1>} : vector<1x256xi32>
    %c16_i32 = arith.constant 16 : i32
    %c0_i32 = arith.constant 0 : i32
    %5 = arith.cmpi eq, %c16_i32, %c0_i32 : i32
    %c1_i32 = arith.constant 1 : i32
    %6 = arith.select %5, %c1_i32, %c16_i32 : i32
    %7 = vector.broadcast %6 : i32 to vector<1x256xi32>
    %8 = arith.remsi %4, %7 : vector<1x256xi32>
    %c0_i32_2 = arith.constant 0 : i32
    %9 = vector.broadcast %c0_i32_2 : i32 to vector<1x256xi32>
    %10 = arith.cmpi ne, %8, %9 : vector<1x256xi32>
    %c0_i32_3 = arith.constant 0 : i32
    %11 = vector.broadcast %c0_i32_3 : i32 to vector<1x256xi32>
    %12 = arith.cmpi slt, %8, %11 : vector<1x256xi32>
    %c0_i32_4 = arith.constant 0 : i32
    %13 = arith.cmpi slt, %6, %c0_i32_4 : i32
    %14 = vector.broadcast %13 : i1 to vector<1x256xi1>
    %15 = vector.broadcast %14 : vector<1x256xi1> to vector<1x256xi1>
    %16 = arith.xori %12, %15 : vector<1x256xi1>
    %17 = arith.andi %16, %10 : vector<1x256xi1>
    %18 = vector.broadcast %6 : i32 to vector<1x256xi32>
    %19 = arith.addi %8, %18 : vector<1x256xi32>
    %20 = arith.select %17, %19, %8 : vector<1x256xi1>, vector<1x256xi32>
    %c0_i32_5 = arith.constant 0 : i32
    %21 = vector.broadcast %c0_i32_5 : i32 to vector<1x256xi32>
    %22 = arith.cmpi sgt, %20, %21 : vector<1x256xi32>
    %c15_i32 = arith.constant 15 : i32
    %23 = vector.broadcast %c15_i32 : i32 to vector<1x256xi32>
    %24 = arith.cmpi slt, %20, %23 : vector<1x256xi32>
    %25 = vector.extract_strided_slice %3 {offsets = [0, 0], sizes = [4, 256], strides = [1, 1]} : vector<4x290xf32> to vector<4x256xf32>
    %cst_6 = arith.constant 0.000000e+00 : f32
    %26 = vector.shape_cast %22 : vector<1x256xi1> to vector<1x256xi1>
    %27 = vector.broadcast %26 : vector<1x256xi1> to vector<4x256xi1>
    %28 = vector.broadcast %cst_6 : f32 to vector<4x256xf32>
    %29 = arith.select %27, %25, %28 : vector<4x256xi1>, vector<4x256xf32>
    %30 = vector.extract_strided_slice %3 {offsets = [0, 1], sizes = [4, 256], strides = [1, 1]} : vector<4x290xf32> to vector<4x256xf32>
    %31 = vector.extract_strided_slice %3 {offsets = [0, 2], sizes = [4, 256], strides = [1, 1]} : vector<4x290xf32> to vector<4x256xf32>
    %cst_7 = arith.constant 0.000000e+00 : f32
    %32 = vector.shape_cast %24 : vector<1x256xi1> to vector<1x256xi1>
    %33 = vector.broadcast %32 : vector<1x256xi1> to vector<4x256xi1>
    %34 = vector.broadcast %cst_7 : f32 to vector<4x256xf32>
    %35 = arith.select %33, %31, %34 : vector<4x256xi1>, vector<4x256xf32>
    %36 = vector.extract_strided_slice %3 {offsets = [0, 16], sizes = [4, 256], strides = [1, 1]} : vector<4x290xf32> to vector<4x256xf32>
    %cst_8 = arith.constant 0.000000e+00 : f32
    %37 = vector.shape_cast %22 : vector<1x256xi1> to vector<1x256xi1>
    %38 = vector.broadcast %37 : vector<1x256xi1> to vector<4x256xi1>
    %39 = vector.broadcast %cst_8 : f32 to vector<4x256xf32>
    %40 = arith.select %38, %36, %39 : vector<4x256xi1>, vector<4x256xf32>
    %41 = vector.extract_strided_slice %3 {offsets = [0, 17], sizes = [4, 256], strides = [1, 1]} : vector<4x290xf32> to vector<4x256xf32>
    %42 = vector.extract_strided_slice %3 {offsets = [0, 18], sizes = [4, 256], strides = [1, 1]} : vector<4x290xf32> to vector<4x256xf32>
    %cst_9 = arith.constant 0.000000e+00 : f32
    %43 = vector.shape_cast %24 : vector<1x256xi1> to vector<1x256xi1>
    %44 = vector.broadcast %43 : vector<1x256xi1> to vector<4x256xi1>
    %45 = vector.broadcast %cst_9 : f32 to vector<4x256xf32>
    %46 = arith.select %44, %42, %45 : vector<4x256xi1>, vector<4x256xf32>
    %47 = vector.extract_strided_slice %3 {offsets = [0, 32], sizes = [4, 256], strides = [1, 1]} : vector<4x290xf32> to vector<4x256xf32>
    %cst_10 = arith.constant 0.000000e+00 : f32
    %48 = vector.shape_cast %22 : vector<1x256xi1> to vector<1x256xi1>
    %49 = vector.broadcast %48 : vector<1x256xi1> to vector<4x256xi1>
    %50 = vector.broadcast %cst_10 : f32 to vector<4x256xf32>
    %51 = arith.select %49, %47, %50 : vector<4x256xi1>, vector<4x256xf32>
    %52 = vector.extract_strided_slice %3 {offsets = [0, 33], sizes = [4, 256], strides = [1, 1]} : vector<4x290xf32> to vector<4x256xf32>
    %53 = vector.extract_strided_slice %3 {offsets = [0, 34], sizes = [4, 256], strides = [1, 1]} : vector<4x290xf32> to vector<4x256xf32>
    %cst_11 = arith.constant 0.000000e+00 : f32
    %54 = vector.shape_cast %24 : vector<1x256xi1> to vector<1x256xi1>
    %55 = vector.broadcast %54 : vector<1x256xi1> to vector<4x256xi1>
    %56 = vector.broadcast %cst_11 : f32 to vector<4x256xf32>
    %57 = arith.select %55, %53, %56 : vector<4x256xi1>, vector<4x256xf32>
    %58 = tpu.concatenate %29, %30, %35, %40, %41, %46, %51, %52, %57 in 0 : vector<4x256xf32>, vector<4x256xf32>, vector<4x256xf32>, vector<4x256xf32>, vector<4x256xf32>, vector<4x256xf32>, vector<4x256xf32>, vector<4x256xf32>, vector<4x256xf32> -> vector<36x256xf32>
    %c0_12 = arith.constant 0 : index
    %c0_13 = arith.constant 0 : index
    %59 = vector.load %arg2[%c0_12, %c0_13] : memref<3x36xf32, #tpu.memory_space<vmem>>, vector<3x36xf32>
    %cst_14 = arith.constant dense<0.000000e+00> : vector<3x256xf32>
    %60 = tpu.matmul %59, %58, %cst_14 {dimension_numbers = #tpu.dot_dimension_numbers<[1], [0], [0], [1], [0, 0, 1, 1], [], []>} : vector<3x36xf32>, vector<36x256xf32>, vector<3x256xf32> -> vector<3x256xf32>
    %c0_15 = arith.constant 0 : index
    %c0_16 = arith.constant 0 : index
    %61 = vector.load %arg3[%c0_15, %c0_16] : memref<3x1xf32, #tpu.memory_space<vmem>>, vector<3x1xf32>
    %62 = vector.broadcast %61 : vector<3x1xf32> to vector<3x256xf32>
    %63 = arith.addf %60, %62 : vector<3x256xf32>
    %c0_17 = arith.constant 0 : index
    %c0_18 = arith.constant 0 : index
    %c0_19 = arith.constant 0 : index
    %64 = vector.load %arg4[%c0_17, %c0_18, %c0_19] : memref<1x3x256xf32, #tpu.memory_space<vmem>>, vector<1x3x256xf32>
    %65 = vector.shape_cast %64 : vector<1x3x256xf32> to vector<3x256xf32>
    %66 = vector.shape_cast %63 : vector<3x256xf32> to vector<1x3x256xf32>
    tpu.vector_store %arg4[%c0_17, %c0_18, %c0_19], %66 {strides = array<i32>} : memref<1x3x256xf32, #tpu.memory_space<vmem>>, vector<1x3x256xf32>,
    return
  }
  func.func @transform_0(%arg0: i32) -> (i32, i32, i32) {
    %c0_i32 = arith.constant 0 : i32
    %c0_i32_0 = arith.constant 0 : i32
    %c0_i32_1 = arith.constant 0 : i32
    return %arg0, %c0_i32, %c0_i32_0 : i32, i32, i32
  }
  func.func @transform_1(%arg0: i32) -> (i32, i32) {
    %c0_i32 = arith.constant 0 : i32
    %c0_i32_0 = arith.constant 0 : i32
    %c0_i32_1 = arith.constant 0 : i32
    return %c0_i32, %c0_i32_0 : i32, i32
  }
  func.func @transform_2(%arg0: i32) -> (i32, i32) {
    %c0_i32 = arith.constant 0 : i32
    %c0_i32_0 = arith.constant 0 : i32
    %c0_i32_1 = arith.constant 0 : i32
    return %c0_i32, %c0_i32_0 : i32, i32
  }
  func.func @transform_3(%arg0: i32) -> (i32, i32, i32) {
    %c0_i32 = arith.constant 0 : i32
    %c0_i32_0 = arith.constant 0 : i32
    %c0_i32_1 = arith.constant 0 : i32
    return %arg0, %c0_i32, %c0_i32_0 : i32, i32, i32
  }
}

</mosaic_0001>

<llo_original>
// kernel: tpu_custom_call.1
$region0: #{tpu_custom_call.1}
  #allocation0 [shape = 'u32[]', space=smem, size = 0x4, offset = 0x4, fixed_abs, tag = 'smem constant byte address 0x4 - core index']
  #allocation1 [shape = 'u32[72,128]{1,0:T(1,128)}', space=vmem, size = 0x9000, scoped, tag = 'internal scratch']
  %s0 = inlined_call_operand.hbm [shape: f32[2,4,256], index: 0, kind: input, shape index: {}]
  %s1 = inlined_call_operand.vmem [shape: f32[3,36], index: 1, kind: input, shape index: {}]
  %s2 = inlined_call_operand.vmem [shape: f32[3,1], index: 2, kind: input, shape index: {}]
  %s3 = inlined_call_operand.vmem [shape: f32[2,3,256], index: 3, kind: output, shape index: {}]
  %s4 = sld [smem:[#allocation0]]
  $region49: #{tpu_custom_call.1} parent=0
    _
  %s6 = ssub.s32 1, %s4
  %s7 = scalar_select 0, %s6, %s4
  $region1: #{tpu_custom_call.1} parent=0
    #allocation2 [shape = 'u8[8192]{0}', space=vmem, size = 0x2000, scoped, tag = 'input window, operand 0']
    #allocation3 [shape = 's32[2]{0}', space=sflag, size = 0x8, scoped, tag = 'scoped memory for tpu_custom_call.1']
    %8 = vsyncpa [#allocation3], 0
    %s9 = scalar_lea.sflag [#allocation3], 1
    %10 = vsyncpa %s9, 0
    loop: start=0, step=1, limit=4
    $region2: #{tpu_custom_call.1} parent=1 // loop_pre_header
      _
    $region3: #{tpu_custom_call.1} parent=1 // loop_header
      %s12 = sphi 0, %s16
      %p13 = scmp.ge.s32.totalorder %s12, 4
      %s22 = sphi 0, %s24
      %s25 = sphi 0, %s22
      %s26 = sphi 0, %s25
      %s42 = sphi 0, %s26
      %s46 = sphi 0, %s46
      %s48 = sphi 0, %s46
      %s49 = sphi 0, %s48
      %s63 = sphi 0, %s49
      %s67 = sphi 0, %s67
      %s69 = sphi 0, %s67
      %s70 = sphi 0, %s69
      %s84 = sphi 0, %s70
      %s90 = sphi 0, %s92
      %s93 = sphi 0, %s90
      %s94 = sphi 0, %s93
      %s110 = sphi 0, %s94
    $region4: #{tpu_custom_call.1} parent=1 // loop_header_branch
      %15 = sbr.rel (%p13) target = $region8
    $region5: #{tpu_custom_call.1} parent=1 // loop_body
      %s17 = ssub.s32 %s12, 1
      %s18 = ssub.s32 %s12, 2
      %s19 = sadd.s32 %s12, 1
      %s20 = ssub.s32 %s12, %s19
      %p21 = scmp.eq.s32.totalorder %s20, 0
      %s23 = sadd.s32 %s22, 1
      %s24 = scalar_select %p21, %s22, %s23
      %p27 = pneg %p21
      %p28 = scmp.eq.s32.totalorder %s12, 1
      %p29 = por %p27, %p28
      %p30 = scmp.ne.s32.totalorder %s22, %s25
      %p31 = scmp.eq.s32.totalorder %s12, 0
      %p32 = por %p30, %p31
      %p33 = scmp.ne.s32.totalorder %s22, %s25
      %p34 = scmp.eq.s32.totalorder %s17, 1
      %p35 = por %p33, %p34
      %p36 = scmp.ne.s32.totalorder %s25, %s26
      %p37 = scmp.eq.s32.totalorder %s17, 0
      %p38 = por %p36, %p37
      %p39 = scmp.ne.s32.totalorder %s25, %s26
      %p40 = scmp.eq.s32.totalorder %s18, 1
      %p41 = por %p39, %p40
      %p43 = scmp.ne.s32.totalorder %s26, %s42
      %p44 = scmp.eq.s32.totalorder %s18, 0
      %p45 = por %p43, %p44
      %s47 = sadd.s32 %s46, 1
      %p50 = scmp.eq.s32.totalorder %s12, 1
      %p51 = scmp.ne.s32.totalorder %s46, %s48
      %p52 = scmp.eq.s32.totalorder %s12, 0
      %p53 = por %p51, %p52
      %p54 = scmp.ne.s32.totalorder %s46, %s48
      %p55 = scmp.eq.s32.totalorder %s17, 1
      %p56 = por %p54, %p55
      %p57 = scmp.ne.s32.totalorder %s48, %s49
      %p58 = scmp.eq.s32.totalorder %s17, 0
      %p59 = por %p57, %p58
      %p60 = scmp.ne.s32.totalorder %s48, %s49
      %p61 = scmp.eq.s32.totalorder %s18, 1
      %p62 = por %p60, %p61
      %p64 = scmp.ne.s32.totalorder %s49, %s63
      %p65 = scmp.eq.s32.totalorder %s18, 0
      %p66 = por %p64, %p65
      %s68 = sadd.s32 %s67, 1
      %p71 = scmp.eq.s32.totalorder %s12, 1
      %p72 = scmp.ne.s32.totalorder %s67, %s69
      %p73 = scmp.eq.s32.totalorder %s12, 0
      %p74 = por %p72, %p73
      %p75 = scmp.ne.s32.totalorder %s67, %s69
      %p76 = scmp.eq.s32.totalorder %s17, 1
      %p77 = por %p75, %p76
      %p78 = scmp.ne.s32.totalorder %s69, %s70
      %p79 = scmp.eq.s32.totalorder %s17, 0
      %p80 = por %p78, %p79
      %p81 = scmp.ne.s32.totalorder %s69, %s70
      %p82 = scmp.eq.s32.totalorder %s18, 1
      %p83 = por %p81, %p82
      %p85 = scmp.ne.s32.totalorder %s70, %s84
      %p86 = scmp.eq.s32.totalorder %s18, 0
      %p87 = por %p85, %p86
      %s88 = ssub.s32 %s12, %s19
      %p89 = scmp.eq.s32.totalorder %s88, 0
      %s91 = sadd.s32 %s90, 1
      %s92 = scalar_select %p89, %s90, %s91
      %p95 = pneg %p89
      %p96 = scmp.eq.s32.totalorder %s12, 1
      %p97 = por %p95, %p96
      %p98 = scmp.ne.s32.totalorder %s90, %s93
      %p99 = scmp.eq.s32.totalorder %s12, 0
      %p100 = por %p98, %p99
      %p101 = scmp.ne.s32.totalorder %s90, %s93
      %p102 = scmp.eq.s32.totalorder %s17, 1
      %p103 = por %p101, %p102
      %p104 = scmp.ne.s32.totalorder %s93, %s94
      %p105 = scmp.eq.s32.totalorder %s17, 0
      %p106 = por %p104, %p105
      %p107 = scmp.ne.s32.totalorder %s93, %s94
      %p108 = scmp.eq.s32.totalorder %s18, 1
      %p109 = por %p107, %p108
      %p111 = scmp.ne.s32.totalorder %s94, %s110
      %p112 = scmp.eq.s32.totalorder %s18, 0
      %p113 = por %p111, %p112
      %p114 = scmp.le.s32.totalorder 1, %s12
      %p115 = scmp.lt.s32.totalorder %s12, 3
      %p116 = pnand %p114, %p115
      %p117 = pneg %p116
      // Predicated region
      $region9: #{tpu_custom_call.1} parent=5 // pred_check
        _
      $region10: #{tpu_custom_call.1} parent=5 // pred_check_branch
        %119 = sbr.rel (%p116) target = $region12
      $region11: #{tpu_custom_call.1} parent=5 // pred_region
        %s120 = ssub.s32 %s12, 1
        // Predicated region
        $region13: #{tpu_custom_call.1} parent=11 // pred_check
          %p121 = pneg %p59
        $region14: #{tpu_custom_call.1} parent=11 // pred_check_branch
          %123 = sbr.rel (%p121) target = $region16
        $region15: #{tpu_custom_call.1} parent=11 // pred_region
          _
        $region16: #{tpu_custom_call.1} parent=11 // pred_fallthru
          _
        // Predicated region
        $region17: #{tpu_custom_call.1} parent=11 // pred_check
          %p124 = pneg %p80
        $region18: #{tpu_custom_call.1} parent=11 // pred_check_branch
          %126 = sbr.rel (%p124) target = $region20
        $region19: #{tpu_custom_call.1} parent=11 // pred_region
          _
        $region20: #{tpu_custom_call.1} parent=11 // pred_fallthru
          _
      $region12: #{tpu_custom_call.1} parent=5 // pred_fallthru
        _
      %p127 = scmp.lt.s32.totalorder %s12, 2
      // Predicated region
      $region21: #{tpu_custom_call.1} parent=5 // pred_check
        %p128 = pneg %p127
      $region22: #{tpu_custom_call.1} parent=5 // pred_check_branch
        %130 = sbr.rel (%p128) target = $region24
      $region23: #{tpu_custom_call.1} parent=5 // pred_region
        // Predicated region
        $region25: #{tpu_custom_call.1} parent=23 // pred_check
          %p131 = pneg %p32
        $region26: #{tpu_custom_call.1} parent=23 // pred_check_branch
          %133 = sbr.rel (%p131) target = $region28
        $region27: #{tpu_custom_call.1} parent=23 // pred_region
          %s134 = sand.u32 %s22, 1
          %s135 = scalar_lea.sflag [#allocation3], %s134
          %s136 = sand.u32 %s22, 1
          %s137 = smul.addr %s136, 8
          %s138 = scalar_lea.vmem [#allocation2], %s137
          %140 = vsyncadd %s135, 0
          %s141 = smul.addr %s12, 2
          %s142 = smul.addr %s141, 4
          %s143 = scalar_lea.hbm %s0, %s142
          %s145 = sshll.u32 %s143, 4
          %s146 = int_to_ptr.hbm [resolvable:$true] %s145
          %s147 = sshll.u32 %s138, 4
          %s148 = int_to_ptr.vmem [resolvable:$true] %s147
          %150 = dma.hbm_to_vmem [thread:$0]  %s146, 128, %s148, %s135
        $region28: #{tpu_custom_call.1} parent=23 // pred_fallthru
          _
      $region24: #{tpu_custom_call.1} parent=5 // pred_fallthru
        _
      %p151 = scmp.le.s32.totalorder 1, %s12
      %p152 = scmp.lt.s32.totalorder %s12, 3
      %p153 = pnand %p151, %p152
      %p154 = pneg %p153
      // Predicated region
      $region29: #{tpu_custom_call.1} parent=5 // pred_check
        _
      $region30: #{tpu_custom_call.1} parent=5 // pred_check_branch
        %156 = sbr.rel (%p153) target = $region32
      $region31: #{tpu_custom_call.1} parent=5 // pred_region
        %s157 = ssub.s32 %s12, 1
        %s158 = sand.u32 %s25, 1
        %s159 = scalar_lea.sflag [#allocation3], %s158
        %s160 = sand.u32 %s25, 1
        %s161 = smul.addr %s160, 8
        %s162 = scalar_lea.vmem [#allocation2], %s161
        // Predicated region
        $region33: #{tpu_custom_call.1} parent=31 // pred_check
          %p163 = pneg %p38
        $region34: #{tpu_custom_call.1} parent=31 // pred_check_branch
          %165 = sbr.rel (%p163) target = $region36
        $region35: #{tpu_custom_call.1} parent=31 // pred_region
          %167 = dma.done %s159, 128
        $region36: #{tpu_custom_call.1} parent=31 // pred_fallthru
          _
        %s168 = sand.u32 %s25, 1
        %s169 = scalar_lea.sflag [#allocation3], %s168
        %s170 = sand.u32 %s25, 1
        %s171 = smul.addr %s170, 8
        %s172 = scalar_lea.vmem [#allocation2], %s171
        %p173 = pneg %p38
        %p174 = pneg %p35
        %p175 = pneg %p59
        %p176 = pneg %p56
        %p177 = pneg %p80
        %p178 = pneg %p77
        %p179 = pneg %p106
        %p180 = pneg %p103
        %p181 = scmp.lt.s32.totalorder %s17, 1
        %s182 = scalar_select %p181, %s17, 1
        %s183 = smul.addr %s182, 2
        %s184 = smul.addr %s183, 4
        %s185 = scalar_lea.vmem %s3, %s184
        %p186 = scmp.lt.s32.totalorder %s17, 1
        %s187 = scalar_select %p186, %s17, 1
        %s188 = smul.addr %s187, 2
        %s189 = smul.addr %s188, 4
        %s190 = scalar_lea.vmem %s3, %s189
        %v191 = vld [vmem:[%s162] sm:$0xff]
        %193 = vst [vmem:[#allocation1] ss:$2 sm:$0xff] %v191
        %v194 = vld.sshfl [vmem:[#allocation1] sm:$0xff pattern:$0x75316420]
        %v195 = vld.sshfl [vmem:[#allocation1 + $0x8] sm:$0xff pattern:$0x75316420]
        %196 = vrot.lane.b32.xlu0 %v194, 17
        %v197 = vpop.permute.xlu0 %196
        %198 = vrot.lane.b32.xlu0 %v195, 17
        %v199 = vpop.permute.xlu0 %198
        %vm200 = vcmask 138240
        %v201 = vsel %vm200, %v197, %v199
        %v205 = vsel %vm200, 0.0, %v197
        %v206 = vsel %vm200, %v199, 0.0
        %v207 = vlaneseq
        %v208 = vand.u32 %v207, 127
        %v209 = vadd.s32 %v208, 128
        %vm210 = vcmp.lt.s32.totalorder %v208, 0
        %v211 = vsub.s32 0, %v208
        %v212 = vsel %vm210, %v211, %v208
        %v213 = vshrl.u32 %v212, 4
        %v214 = vand.u32 %v212, 15
        %v215 = vsub.s32 0, %v214
        %v216 = vsel %vm210, %v215, %v214
        %vm217 = vcmp.lt.s32.totalorder %v209, 0
        %v218 = vsub.s32 0, %v209
        %v219 = vsel %vm217, %v218, %v209
        %v220 = vshrl.u32 %v219, 4
        %v221 = vand.u32 %v219, 15
        %v222 = vsub.s32 0, %v221
        %v223 = vsel %vm217, %v222, %v221
        %vm224 = vcmp.ne.s32.totalorder %v216, 0
        %vm225 = vcmp.ne.s32.totalorder %v223, 0
        %vm226 = vcmp.lt.s32.totalorder %v216, 0
        %vm227 = vcmp.lt.s32.totalorder %v223, 0
        %vm228 = vmand %vm226, %vm224
        %vm229 = vmand %vm227, %vm225
        %v230 = vadd.s32 %v216, 16
        %v231 = vadd.s32 %v223, 16
        %v232 = vsel %vm228, %v230, %v216
        %v233 = vsel %vm229, %v231, %v223
        %vm234 = vcmp.gt.s32.totalorder %v232, 0
        %vm235 = vcmp.gt.s32.totalorder %v233, 0
        %vm236 = vcmp.lt.s32.totalorder %v232, 15
        %vm237 = vcmp.lt.s32.totalorder %v233, 15
        %v238 = vsel %vm234, 1, 0
        %v239 = vsel %vm235, 1, 0
        %vm240 = vcmp.eq.s32.totalorder %v238, 1
        %vm241 = vcmp.eq.s32.totalorder %v239, 1
        %v242 = vsel %vm240, %v205, 0.0
        %v243 = vsel %vm241, %v201, 0.0
        %v244 = vsel %vm236, 1, 0
        %v245 = vsel %vm237, 1, 0
        %vm246 = vcmp.eq.s32.totalorder %v244, 1
        %vm247 = vcmp.eq.s32.totalorder %v245, 1
        %250 = vrot.lane.b32.xlu0 %v205, 126
        %v251 = vpop.permute.xlu0 %250
        %252 = vrot.lane.b32.xlu0 %v201, 126
        %v253 = vpop.permute.xlu0 %252
        %254 = vrot.lane.b32.xlu0 %v206, 126
        %v255 = vpop.permute.xlu0 %254
        %vm256 = vcmask 1031168
        %v257 = vsel %vm256, %v251, %v253
        %v258 = vsel %vm256, %v253, %v255
        %v261 = vsel %vm246, %v257, 0.0
        %v262 = vsel %vm247, %v258, 0.0
        %263 = vrot.lane.b32.xlu0 %v205, 112
        %v264 = vpop.permute.xlu0 %263
        %265 = vrot.lane.b32.xlu0 %v201, 112
        %v266 = vpop.permute.xlu0 %265
        %267 = vrot.lane.b32.xlu0 %v206, 112
        %v268 = vpop.permute.xlu0 %267
        %vm269 = vcmask 916480
        %v270 = vsel %vm269, %v264, %v266
        %v271 = vsel %vm269, %v266, %v268
        %v274 = vsel %vm240, %v270, 0.0
        %v275 = vsel %vm241, %v271, 0.0
        %276 = vrot.lane.b32.xlu0 %v205, 110
        %v277 = vpop.permute.xlu0 %276
        %278 = vrot.lane.b32.xlu0 %v201, 110
        %v279 = vpop.permute.xlu0 %278
        %280 = vrot.lane.b32.xlu0 %v206, 110
        %v281 = vpop.permute.xlu0 %280
        %vm282 = vcmask 900096
        %v283 = vsel %vm282, %v277, %v279
        %v284 = vsel %vm282, %v279, %v281
        %v287 = vsel %vm246, %v283, 0.0
        %v288 = vsel %vm247, %v284, 0.0
        %289 = vrot.lane.b32.xlu0 %v205, 96
        %v290 = vpop.permute.xlu0 %289
        %291 = vrot.lane.b32.xlu0 %v201, 96
        %v292 = vpop.permute.xlu0 %291
        %293 = vrot.lane.b32.xlu0 %v206, 96
        %v294 = vpop.permute.xlu0 %293
        %vm295 = vcmask 785408
        %v296 = vsel %vm295, %v290, %v292
        %v297 = vsel %vm295, %v292, %v294
        %v300 = vsel %vm240, %v296, 0.0
        %v301 = vsel %vm241, %v297, 0.0
        %302 = vrot.lane.b32.xlu0 %v205, 94
        %v303 = vpop.permute.xlu0 %302
        %304 = vrot.lane.b32.xlu0 %v201, 94
        %v305 = vpop.permute.xlu0 %304
        %306 = vrot.lane.b32.xlu0 %v206, 94
        %v307 = vpop.permute.xlu0 %306
        %vm308 = vcmask 769024
        %v309 = vsel %vm308, %v303, %v305
        %v310 = vsel %vm308, %v305, %v307
        %v313 = vsel %vm246, %v309, 0.0
        %v314 = vsel %vm247, %v310, 0.0
        %v315 = vrot.slane %v205, 4
        %v316 = vrot.slane %v201, 4
        %v317 = vrot.slane %v206, 4
        %318 = vrot.lane.b32.xlu0 %v315, 127
        %v319 = vpop.permute.xlu0 %318
        %320 = vrot.lane.b32.xlu0 %v316, 127
        %v321 = vpop.permute.xlu0 %320
        %322 = vrot.lane.b32.xlu0 %v317, 127
        %v323 = vpop.permute.xlu0 %322
        %vm324 = vcmask 1039360
        %v325 = vsel %vm324, %v319, %v321
        %v326 = vsel %vm324, %v321, %v323
        %v331 = vrot.slane %v274, 4
        %v332 = vrot.slane %v275, 4
        %335 = vrot.lane.b32.xlu0 %v205, 111
        %v336 = vpop.permute.xlu0 %335
        %337 = vrot.lane.b32.xlu0 %v201, 111
        %v338 = vpop.permute.xlu0 %337
        %339 = vrot.lane.b32.xlu0 %v206, 111
        %v340 = vpop.permute.xlu0 %339
        %vm341 = vcmask 908288
        %v342 = vsel %vm341, %v336, %v338
        %v343 = vsel %vm341, %v338, %v340
        %v348 = vrot.slane %v287, 4
        %v349 = vrot.slane %v288, 4
        %352 = vrot.lane.b32.xlu0 %v315, 95
        %v353 = vpop.permute.xlu0 %352
        %354 = vrot.lane.b32.xlu0 %v316, 95
        %v355 = vpop.permute.xlu0 %354
        %356 = vrot.lane.b32.xlu0 %v317, 95
        %v357 = vpop.permute.xlu0 %356
        %vm358 = vcmask 777216
        %v359 = vsel %vm358, %v353, %v355
        %v360 = vsel %vm358, %v355, %v357
        %vm363 = vcmask 1043456
        %v364 = vsel %vm363, %v242, %v325
        %v365 = vsel %vm363, %v243, %v326
        %v366 = vsel %vm363, %v261, %v331
        %v367 = vsel %vm363, %v262, %v332
        %v368 = vsel %vm363, %v342, %v348
        %v369 = vsel %vm363, %v343, %v349
        %v370 = vsel %vm363, %v300, %v359
        %v371 = vsel %vm363, %v301, %v360
        %v372 = vld [vmem:[%s1] sm:$0x7]
        %v373 = vld [vmem:[%s2] sm:$0x7]
        %375 = vset.pattern.permute.xlu0 0
        %376 = vperm.xlu0 %375, %v373
        %v377 = vpop.permute.xlu0 %376
        %vm379 = vcmask 293888
        %v381 = vsel %vm379, %v372, 0
        %v384 = vsel %vm363, %v313, 0
        %v387 = vsel %vm363, %v314, 0
        %389 = vmatpush.msra.mxu0 0.0
        %390 = vmatpush.msra.mxu0 0.0
        %391 = vmatpush.msra.mxu0 0.0
        %392 = vmatpush.msra.mxu0 0.0
        %393 = vmatpush.msra.mxu0 0.0
        %394 = vmatpush.msra.mxu0 0.0
        %395 = vmatpush.msra.mxu0 0.0
        %396 = vmatpush.msra.mxu0 0.0
        %397 = vmatpush.msra.mxu0 0.0
        %398 = vmatpush.msra.mxu0 0.0
        %399 = vmatpush.msra.mxu0 0.0
        %400 = vmatpush.msra.mxu0 %v384
        %401 = vmatpush.msra.mxu0 %v370
        %402 = vmatpush.msra.mxu0 %v368
        %403 = vmatpush.msra.mxu0 %v366
        %404 = vmatpush.msra.mxu0 %v364
        %405 = vmatmul.f32.gmra.mxu0 %v381
        %v406 = vpop.f32.mrf.mxu0
        %v407 = vadd.f32 %v377, %v406
        %408 = vdwg.mxu0
        %409 = vmatpush.msra.mxu0 0.0
        %410 = vmatpush.msra.mxu0 0.0
        %411 = vmatpush.msra.mxu0 0.0
        %412 = vmatpush.msra.mxu0 0.0
        %413 = vmatpush.msra.mxu0 0.0
        %414 = vmatpush.msra.mxu0 0.0
        %415 = vmatpush.msra.mxu0 0.0
        %416 = vmatpush.msra.mxu0 0.0
        %417 = vmatpush.msra.mxu0 0.0
        %418 = vmatpush.msra.mxu0 0.0
        %419 = vmatpush.msra.mxu0 0.0
        %420 = vmatpush.msra.mxu0 %v387
        %421 = vmatpush.msra.mxu0 %v371
        %422 = vmatpush.msra.mxu0 %v369
        %423 = vmatpush.msra.mxu0 %v367
        %424 = vmatpush.msra.mxu0 %v365
        %425 = vmatmul.f32.gmra.mxu0 %v381
        %v426 = vpop.f32.mrf.mxu0
        %v427 = vadd.f32 %v377, %v426
        %428 = vdwg.mxu0
        %v431 = vrot.slane %v427, 4
        %v432 = vsel %vm363, %v407, %v431
        %434 = vst [vmem:[%s190] sm:$0x77] %v432
        %p435 = scmp.lt.s32.totalorder %s17, 1
        %s436 = scalar_select %p435, %s17, 1
        %s437 = smul.addr %s436, 2
        %s438 = smul.addr %s437, 4
        %s439 = scalar_lea.vmem %s3, %s438
        // Predicated region
        $region37: #{tpu_custom_call.1} parent=31 // pred_check
          %p440 = pneg %p103
        $region38: #{tpu_custom_call.1} parent=31 // pred_check_branch
          %442 = sbr.rel (%p440) target = $region40
        $region39: #{tpu_custom_call.1} parent=31 // pred_region
          _
        $region40: #{tpu_custom_call.1} parent=31 // pred_fallthru
          _
      $region32: #{tpu_custom_call.1} parent=5 // pred_fallthru
        _
      %p443 = scmp.le.s32.totalorder 2, %s12
      // Predicated region
      $region41: #{tpu_custom_call.1} parent=5 // pred_check
        %p444 = pneg %p443
      $region42: #{tpu_custom_call.1} parent=5 // pred_check_branch
        %446 = sbr.rel (%p444) target = $region44
      $region43: #{tpu_custom_call.1} parent=5 // pred_region
        %s447 = ssub.s32 %s12, 2
        // Predicated region
        $region45: #{tpu_custom_call.1} parent=43 // pred_check
          %p448 = pneg %p109
        $region46: #{tpu_custom_call.1} parent=43 // pred_check_branch
          %450 = sbr.rel (%p448) target = $region48
        $region47: #{tpu_custom_call.1} parent=43 // pred_region
          %p451 = scmp.lt.s32.totalorder %s18, 1
          %s452 = scalar_select %p451, %s18, 1
          %s453 = smul.addr %s452, 2
          %s454 = smul.addr %s453, 4
          %s455 = scalar_lea.vmem %s3, %s454
        $region48: #{tpu_custom_call.1} parent=43 // pred_fallthru
          _
      $region44: #{tpu_custom_call.1} parent=5 // pred_fallthru
        _
    $region6: #{tpu_custom_call.1} parent=1 // loop_footer
      %s16 = sadd.s32 1, %s12
    $region7: #{tpu_custom_call.1} parent=1 // loop_footer_branch
      %11 = sbr.rel target = $region3
    $region8: #{tpu_custom_call.1} parent=1 // loop_exit
      _
    %456 = vsyncpa [#allocation3], 1
    %s457 = scalar_lea.sflag [#allocation3], 1
    %458 = vsyncpa %s457, 1

</llo_original>
